<compile_context>
chip_gen: v6e
topology: v6e:2x2x1
jax: 0.10.0
libtpu: 0.0.40
codegen_flags: <defaults>
</compile_context>

<pallas_src>
import functools

import jax
import jax.numpy as jnp
from jax.experimental import pallas as pl
from jax.experimental.pallas import tpu as pltpu


LAYER_SIZES = [(16, 9), (9, 9), (9, 9), (9, 9), (9, 4)]   # (fan_in, fan_out)
N_LAYERS = len(LAYER_SIZES)
PAD = 16                       # uniform padded (16, 16) dot shape, all layers
OUT_FEATURES = LAYER_SIZES[-1][1]   # 4
OUT_PAD = 8                    # output rows padded to one f32 sublane tile


def _round_up(n, m):
    return ((n + m - 1) // m) * m


def _sigmoid(x):
    # One EUP push (tanh) per element; mathematically exact sigmoid.
    return 0.5 * (jnp.tanh(0.5 * x) + 1.0)


def mlp_kernel(x_ref, w_ref, b_ref, o_ref):
    # x_ref: (16, bm) bf16   w_ref: (5, 16, 16) bf16 (out, in)
    # b_ref: (5, 16, 1) f32  o_ref: (8, bm) f32
    op_dtype = w_ref.dtype
    h = x_ref[...]                                   # bf16, lane-dense
    # Fully unrolled static loop over the 4 hidden layers: bf16 MXU dot with
    # f32 accumulate, f32 bias add + sigmoid (v5e-safe), re-cast to bf16.
    for l in range(N_LAYERS - 1):
        z = jnp.dot(w_ref[l], h,
                    preferred_element_type=jnp.float32) + b_ref[l]
        h = _sigmoid(z).astype(op_dtype)
    out = jnp.dot(w_ref[N_LAYERS - 1], h,
                  preferred_element_type=jnp.float32) + b_ref[N_LAYERS - 1]
    # Rows 4..15 of `out` are zero padding; store only the first 8 sublanes
    # (one f32 sublane tile) -- tile-aligned slice, unmasked full-lane store.
    o_ref[...] = out[:OUT_PAD, :].astype(o_ref.dtype)


@functools.partial(jax.jit, static_argnames=("bm",))
def net_forward(x, w_stack, b_stack, *, bm=2048):
    """x: (B, 16) float.  w_stack: (5, 16, 16) bf16.  b_stack: (5, 16, 1) f32.

    Returns (B, 4) f32, matching Net.forward (no final sigmoid)."""
    B = x.shape[0]
    # Batch lives on the 128-lane axis -> tile must be a multiple of 128.
    bm = min(bm, _round_up(max(B, 128), 128))
    B_pad = _round_up(B, bm)

    # Layout plumbing in the wrapper: bf16 cast + transpose to (16, B_pad).
    x_t = x.astype(jnp.bfloat16).T                   # (16, B)
    if B_pad != B:
        x_t = jnp.pad(x_t, ((0, 0), (0, B_pad - B)))

    out_padded = pl.pallas_call(
        mlp_kernel,
        out_shape=jax.ShapeDtypeStruct((OUT_PAD, B_pad), jnp.float32),
        grid_spec=pltpu.PrefetchScalarGridSpec(
            num_scalar_prefetch=0,
            grid=(B_pad // bm,),
            in_specs=[
                # Activations: tiled over batch lanes -> auto double-buffered.
                pl.BlockSpec((PAD, bm), lambda i: (0, i)),
                # Packed weights / biases: constant block index -> stay
                # VMEM-resident across all grid steps (single DMA each).
                pl.BlockSpec((N_LAYERS, PAD, PAD), lambda i: (0, 0, 0)),
                pl.BlockSpec((N_LAYERS, PAD, 1), lambda i: (0, 0, 0)),
            ],
            out_specs=pl.BlockSpec((OUT_PAD, bm), lambda i: (0, i)),
        ),
        compiler_params=pltpu.CompilerParams(
            dimension_semantics=("parallel",),
        ),
    )(x_t, w_stack, b_stack)

    return out_padded[:OUT_FEATURES, :B].T           # (B, 4) f32


def init_packed_params(key, op_dtype=jnp.bfloat16):
    """PyTorch nn.Linear default init (uniform +-1/sqrt(fan_in)), packed as
    (out, in) and zero-padded to uniform (16, 16) / (16, 1) slabs."""
    w_stack = jnp.zeros((N_LAYERS, PAD, PAD), jnp.float32)
    b_stack = jnp.zeros((N_LAYERS, PAD, 1), jnp.float32)
    for l, (fan_in, fan_out) in enumerate(LAYER_SIZES):
        key, kw, kb = jax.random.split(key, 3)
        bound = 1.0 / (fan_in ** 0.5)
        w = jax.random.uniform(kw, (fan_out, fan_in), jnp.float32, -bound, bound)
        b = jax.random.uniform(kb, (fan_out,), jnp.float32, -bound, bound)
        w_stack = w_stack.at[l, :fan_out, :fan_in].set(w)
        b_stack = b_stack.at[l, :fan_out, 0].set(b)
    # Padding rows/cols MUST stay exactly zero: the kernel relies on
    # sigmoid(0)=0.5 in padded rows hitting zero weight columns next layer.
    for l, (fan_in, fan_out) in enumerate(LAYER_SIZES):
        assert not bool(jnp.any(w_stack[l, fan_out:, :]))
        assert not bool(jnp.any(w_stack[l, :, fan_in:]))
        assert not bool(jnp.any(b_stack[l, fan_out:, 0]))
    return w_stack.astype(op_dtype), b_stack


def reference_forward(x, w_stack, b_stack):
    """Plain-JAX reference using the same bf16-quantized packed weights and the
    same per-layer bf16 activation re-cast as the kernel."""
    h = x.astype(jnp.bfloat16)
    for l in range(N_LAYERS - 1):
        z = jnp.dot(h, w_stack[l].T,
                    preferred_element_type=jnp.float32) + b_stack[l][:, 0]
        h = jax.nn.sigmoid(z).astype(jnp.bfloat16)
    out = jnp.dot(h, w_stack[N_LAYERS - 1].T,
                  preferred_element_type=jnp.float32) + b_stack[N_LAYERS - 1][:, 0]
    return out[:, :OUT_FEATURES]


if __name__ == "__main__":
    key = jax.random.PRNGKey(0)
    key, kx = jax.random.split(key)
    B = 8
    # 15 raycast distances + car speed -> 16 input features.
    x = jax.random.normal(kx, (B, 16), jnp.float32)

    w_stack, b_stack = init_packed_params(key)

    out = jax.block_until_ready(net_forward(x, w_stack, b_stack))
    ref = reference_forward(x, w_stack, b_stack)

    assert out.shape == (B, OUT_FEATURES)
    # Kernel and reference share the same bf16-quantized weights and activation
    # casts; residual difference is only EUP tanh vs. jax.nn.sigmoid rounding.
    assert jnp.allclose(out, ref, atol=1e-2, rtol=1e-2)

    print("KERNEL_OK")
</pallas_src>

<mosaic_0001>
module attributes {stable_mosaic.version = 11 : i64} {
  func.func @mlp_kernel(%arg0: i32, %arg1: memref<16x128xbf16, #tpu.memory_space<vmem>>, %arg2: memref<5x16x16xbf16, #tpu.memory_space<vmem>>, %arg3: memref<5x16x1xf32, #tpu.memory_space<vmem>>, %arg4: memref<8x128xf32, #tpu.memory_space<vmem>>) attributes {dimension_semantics = [#tpu.dimension_semantics<parallel>], iteration_bounds = array<i64: 1>, scalar_prefetch = 0 : i64, scratch_operands = 0 : i64, tpu.core_type = #tpu.core_type<tc>, window_params = [{transform_indices = @transform_0, window_bounds = array<i64: 16, 128>}, {pipeline_mode = #tpu.pipeline_mode<synchronous>, transform_indices = @transform_1, window_bounds = array<i64: 5, 16, 16>}, {pipeline_mode = #tpu.pipeline_mode<synchronous>, transform_indices = @transform_2, window_bounds = array<i64: 5, 16, 1>}, {transform_indices = @transform_3, window_bounds = array<i64: 8, 128>}]} {
    %c0 = arith.constant 0 : index
    %c0_0 = arith.constant 0 : index
    %0 = vector.load %arg1[%c0, %c0_0] : memref<16x128xbf16, #tpu.memory_space<vmem>>, vector<16x128xbf16>
    %c0_1 = arith.constant 0 : index
    %c0_2 = arith.constant 0 : index
    %c0_3 = arith.constant 0 : index
    %1 = vector.load %arg2[%c0_1, %c0_2, %c0_3] : memref<5x16x16xbf16, #tpu.memory_space<vmem>>, vector<1x16x16xbf16>
    %2 = vector.shape_cast %1 : vector<1x16x16xbf16> to vector<16x16xbf16>
    %cst = arith.constant dense<0.000000e+00> : vector<16x128xf32>
    %3 = tpu.matmul %2, %0, %cst {dimension_numbers = #tpu.dot_dimension_numbers<[1], [0], [0], [1], [0, 0, 1, 1], [], []>} : vector<16x16xbf16>, vector<16x128xbf16>, vector<16x128xf32> -> vector<16x128xf32>
    %c0_4 = arith.constant 0 : index
    %c0_5 = arith.constant 0 : index
    %c0_6 = arith.constant 0 : index
    %4 = vector.load %arg3[%c0_4, %c0_5, %c0_6] : memref<5x16x1xf32, #tpu.memory_space<vmem>>, vector<1x16x1xf32>
    %5 = vector.shape_cast %4 : vector<1x16x1xf32> to vector<16x1xf32>
    %6 = vector.broadcast %5 : vector<16x1xf32> to vector<16x128xf32>
    %7 = arith.addf %3, %6 : vector<16x128xf32>
    %cst_7 = arith.constant 5.000000e-01 : f32
    %8 = vector.broadcast %cst_7 : f32 to vector<16x128xf32>
    %9 = arith.mulf %8, %7 : vector<16x128xf32>
    %10 = math.tanh %9 : vector<16x128xf32>
    %cst_8 = arith.constant 1.000000e+00 : f32
    %11 = vector.broadcast %cst_8 : f32 to vector<16x128xf32>
    %12 = arith.addf %10, %11 : vector<16x128xf32>
    %cst_9 = arith.constant 5.000000e-01 : f32
    %13 = vector.broadcast %cst_9 : f32 to vector<16x128xf32>
    %14 = arith.mulf %13, %12 : vector<16x128xf32>
    %15 = arith.truncf %14 : vector<16x128xf32> to vector<16x128xbf16>
    %c1 = arith.constant 1 : index
    %c0_10 = arith.constant 0 : index
    %c0_11 = arith.constant 0 : index
    %16 = vector.load %arg2[%c1, %c0_10, %c0_11] : memref<5x16x16xbf16, #tpu.memory_space<vmem>>, vector<1x16x16xbf16>
    %17 = vector.shape_cast %16 : vector<1x16x16xbf16> to vector<16x16xbf16>
    %cst_12 = arith.constant dense<0.000000e+00> : vector<16x128xf32>
    %18 = tpu.matmul %17, %15, %cst_12 {dimension_numbers = #tpu.dot_dimension_numbers<[1], [0], [0], [1], [0, 0, 1, 1], [], []>} : vector<16x16xbf16>, vector<16x128xbf16>, vector<16x128xf32> -> vector<16x128xf32>
    %c1_13 = arith.constant 1 : index
    %c0_14 = arith.constant 0 : index
    %c0_15 = arith.constant 0 : index
    %19 = vector.load %arg3[%c1_13, %c0_14, %c0_15] : memref<5x16x1xf32, #tpu.memory_space<vmem>>, vector<1x16x1xf32>
    %20 = vector.shape_cast %19 : vector<1x16x1xf32> to vector<16x1xf32>
    %21 = vector.broadcast %20 : vector<16x1xf32> to vector<16x128xf32>
    %22 = arith.addf %18, %21 : vector<16x128xf32>
    %cst_16 = arith.constant 5.000000e-01 : f32
    %23 = vector.broadcast %cst_16 : f32 to vector<16x128xf32>
    %24 = arith.mulf %23, %22 : vector<16x128xf32>
    %25 = math.tanh %24 : vector<16x128xf32>
    %cst_17 = arith.constant 1.000000e+00 : f32
    %26 = vector.broadcast %cst_17 : f32 to vector<16x128xf32>
    %27 = arith.addf %25, %26 : vector<16x128xf32>
    %cst_18 = arith.constant 5.000000e-01 : f32
    %28 = vector.broadcast %cst_18 : f32 to vector<16x128xf32>
    %29 = arith.mulf %28, %27 : vector<16x128xf32>
    %30 = arith.truncf %29 : vector<16x128xf32> to vector<16x128xbf16>
    %c2 = arith.constant 2 : index
    %c0_19 = arith.constant 0 : index
    %c0_20 = arith.constant 0 : index
    %31 = vector.load %arg2[%c2, %c0_19, %c0_20] : memref<5x16x16xbf16, #tpu.memory_space<vmem>>, vector<1x16x16xbf16>
    %32 = vector.shape_cast %31 : vector<1x16x16xbf16> to vector<16x16xbf16>
    %cst_21 = arith.constant dense<0.000000e+00> : vector<16x128xf32>
    %33 = tpu.matmul %32, %30, %cst_21 {dimension_numbers = #tpu.dot_dimension_numbers<[1], [0], [0], [1], [0, 0, 1, 1], [], []>} : vector<16x16xbf16>, vector<16x128xbf16>, vector<16x128xf32> -> vector<16x128xf32>
    %c2_22 = arith.constant 2 : index
    %c0_23 = arith.constant 0 : index
    %c0_24 = arith.constant 0 : index
    %34 = vector.load %arg3[%c2_22, %c0_23, %c0_24] : memref<5x16x1xf32, #tpu.memory_space<vmem>>, vector<1x16x1xf32>
    %35 = vector.shape_cast %34 : vector<1x16x1xf32> to vector<16x1xf32>
    %36 = vector.broadcast %35 : vector<16x1xf32> to vector<16x128xf32>
    %37 = arith.addf %33, %36 : vector<16x128xf32>
    %cst_25 = arith.constant 5.000000e-01 : f32
    %38 = vector.broadcast %cst_25 : f32 to vector<16x128xf32>
    %39 = arith.mulf %38, %37 : vector<16x128xf32>
    %40 = math.tanh %39 : vector<16x128xf32>
    %cst_26 = arith.constant 1.000000e+00 : f32
    %41 = vector.broadcast %cst_26 : f32 to vector<16x128xf32>
    %42 = arith.addf %40, %41 : vector<16x128xf32>
    %cst_27 = arith.constant 5.000000e-01 : f32
    %43 = vector.broadcast %cst_27 : f32 to vector<16x128xf32>
    %44 = arith.mulf %43, %42 : vector<16x128xf32>
    %45 = arith.truncf %44 : vector<16x128xf32> to vector<16x128xbf16>
    %c3 = arith.constant 3 : index
    %c0_28 = arith.constant 0 : index
    %c0_29 = arith.constant 0 : index
    %46 = vector.load %arg2[%c3, %c0_28, %c0_29] : memref<5x16x16xbf16, #tpu.memory_space<vmem>>, vector<1x16x16xbf16>
    %47 = vector.shape_cast %46 : vector<1x16x16xbf16> to vector<16x16xbf16>
    %cst_30 = arith.constant dense<0.000000e+00> : vector<16x128xf32>
    %48 = tpu.matmul %47, %45, %cst_30 {dimension_numbers = #tpu.dot_dimension_numbers<[1], [0], [0], [1], [0, 0, 1, 1], [], []>} : vector<16x16xbf16>, vector<16x128xbf16>, vector<16x128xf32> -> vector<16x128xf32>
    %c3_31 = arith.constant 3 : index
    %c0_32 = arith.constant 0 : index
    %c0_33 = arith.constant 0 : index
    %49 = vector.load %arg3[%c3_31, %c0_32, %c0_33] : memref<5x16x1xf32, #tpu.memory_space<vmem>>, vector<1x16x1xf32>
    %50 = vector.shape_cast %49 : vector<1x16x1xf32> to vector<16x1xf32>
    %51 = vector.broadcast %50 : vector<16x1xf32> to vector<16x128xf32>
    %52 = arith.addf %48, %51 : vector<16x128xf32>
    %cst_34 = arith.constant 5.000000e-01 : f32
    %53 = vector.broadcast %cst_34 : f32 to vector<16x128xf32>
    %54 = arith.mulf %53, %52 : vector<16x128xf32>
    %55 = math.tanh %54 : vector<16x128xf32>
    %cst_35 = arith.constant 1.000000e+00 : f32
    %56 = vector.broadcast %cst_35 : f32 to vector<16x128xf32>
    %57 = arith.addf %55, %56 : vector<16x128xf32>
    %cst_36 = arith.constant 5.000000e-01 : f32
    %58 = vector.broadcast %cst_36 : f32 to vector<16x128xf32>
    %59 = arith.mulf %58, %57 : vector<16x128xf32>
    %60 = arith.truncf %59 : vector<16x128xf32> to vector<16x128xbf16>
    %c4 = arith.constant 4 : index
    %c0_37 = arith.constant 0 : index
    %c0_38 = arith.constant 0 : index
    %61 = vector.load %arg2[%c4, %c0_37, %c0_38] : memref<5x16x16xbf16, #tpu.memory_space<vmem>>, vector<1x16x16xbf16>
    %62 = vector.shape_cast %61 : vector<1x16x16xbf16> to vector<16x16xbf16>
    %cst_39 = arith.constant dense<0.000000e+00> : vector<16x128xf32>
    %63 = tpu.matmul %62, %60, %cst_39 {dimension_numbers = #tpu.dot_dimension_numbers<[1], [0], [0], [1], [0, 0, 1, 1], [], []>} : vector<16x16xbf16>, vector<16x128xbf16>, vector<16x128xf32> -> vector<16x128xf32>
    %c4_40 = arith.constant 4 : index
    %c0_41 = arith.constant 0 : index
    %c0_42 = arith.constant 0 : index
    %64 = vector.load %arg3[%c4_40, %c0_41, %c0_42] : memref<5x16x1xf32, #tpu.memory_space<vmem>>, vector<1x16x1xf32>
    %65 = vector.shape_cast %64 : vector<1x16x1xf32> to vector<16x1xf32>
    %66 = vector.broadcast %65 : vector<16x1xf32> to vector<16x128xf32>
    %67 = arith.addf %63, %66 : vector<16x128xf32>
    %68 = vector.extract_strided_slice %67 {offsets = [0, 0], sizes = [8, 128], strides = [1, 1]} : vector<16x128xf32> to vector<8x128xf32>
    %c0_43 = arith.constant 0 : index
    %c0_44 = arith.constant 0 : index
    %69 = vector.load %arg4[%c0_43, %c0_44] : memref<8x128xf32, #tpu.memory_space<vmem>>, vector<8x128xf32>
    tpu.vector_store %arg4[%c0_43, %c0_44], %68 {strides = array<i32>} : memref<8x128xf32, #tpu.memory_space<vmem>>, vector<8x128xf32>,
    return
  }
  func.func @transform_0(%arg0: i32) -> (i32, i32) {
    %c0_i32 = arith.constant 0 : i32
    %c0_i32_0 = arith.constant 0 : i32
    return %c0_i32, %arg0 : i32, i32
  }
  func.func @transform_1(%arg0: i32) -> (i32, i32, i32) {
    %c0_i32 = arith.constant 0 : i32
    %c0_i32_0 = arith.constant 0 : i32
    %c0_i32_1 = arith.constant 0 : i32
    %c0_i32_2 = arith.constant 0 : i32
    return %c0_i32, %c0_i32_0, %c0_i32_1 : i32, i32, i32
  }
  func.func @transform_2(%arg0: i32) -> (i32, i32, i32) {
    %c0_i32 = arith.constant 0 : i32
    %c0_i32_0 = arith.constant 0 : i32
    %c0_i32_1 = arith.constant 0 : i32
    %c0_i32_2 = arith.constant 0 : i32
    return %c0_i32, %c0_i32_0, %c0_i32_1 : i32, i32, i32
  }
  func.func @transform_3(%arg0: i32) -> (i32, i32) {
    %c0_i32 = arith.constant 0 : i32
    %c0_i32_0 = arith.constant 0 : i32
    return %c0_i32, %arg0 : i32, i32
  }
}

</mosaic_0001>

<llo_original>
// kernel: net_forward.1
$region0: #{net_forward.1}
  #allocation0 [shape = 'u32[]', space=smem, size = 0x4, offset = 0x4, fixed_abs, tag = 'smem constant byte address 0x4 - core index']
  #allocation1 [shape = 'u32[144,128]{1,0:T(1,128)}', space=vmem, size = 0x12000, scoped, tag = 'internal scratch']
  %s0 = inlined_call_operand.vmem [shape: bf16[16,128], index: 0, kind: input, shape index: {}]
  %s1 = inlined_call_operand.vmem [shape: bf16[5,16,16], index: 1, kind: input, shape index: {}]
  %s2 = inlined_call_operand.vmem [shape: f32[5,16,1], index: 2, kind: input, shape index: {}]
  %s3 = inlined_call_operand.vmem [shape: f32[8,128], index: 3, kind: output, shape index: {}]
  %s4 = sld [smem:[#allocation0]]
  $region22: #{net_forward.1} parent=0
    _
  %s6 = ssub.s32 1, %s4
  %s7 = scalar_select 0, %s6, %s4
  // Predicated region
  $region2: #{net_forward.1} parent=0 // pred_check
    _
  $region3: #{net_forward.1} parent=0 // pred_check_branch
    %9 = sbr.rel (0) target = $region5
  $region4: #{net_forward.1} parent=0 // pred_region
    _
  $region5: #{net_forward.1} parent=0 // pred_fallthru
    _
  // Predicated region
  $region6: #{net_forward.1} parent=0 // pred_check
    _
  $region7: #{net_forward.1} parent=0 // pred_check_branch
    %11 = sbr.rel (0) target = $region9
  $region8: #{net_forward.1} parent=0 // pred_region
    _
  $region9: #{net_forward.1} parent=0 // pred_fallthru
    _
  // Predicated region
  $region10: #{net_forward.1} parent=0 // pred_check
    _
  $region11: #{net_forward.1} parent=0 // pred_check_branch
    %13 = sbr.rel (0) target = $region13
  $region12: #{net_forward.1} parent=0 // pred_region
    _
  $region13: #{net_forward.1} parent=0 // pred_fallthru
    _
  %v15 = vld [vmem:[%s0] sm:$0xf]
  %v16 = vld [vmem:[%s0 + $0x4] sm:$0xf]
  %v17 = vld [vmem:[%s1] sm:$0xf]
  %v18 = vld [vmem:[%s1 + $0x4] sm:$0xf]
  %v19 = vld [vmem:[%s2] sm:$0xff]
  %v20 = vld [vmem:[%s2 + $0x8] sm:$0xff]
  %22 = vset.pattern.permute.xlu0 0
  %23 = vperm.xlu0 %22, %v19
  %v24 = vpop.permute.xlu0 %23
  %27 = vset.pattern.permute.xlu0 0
  %28 = vperm.xlu0 %27, %v20
  %v29 = vpop.permute.xlu0 %28
  %v33 = vunpack.c.l.b16 %v17
  %v34 = vunpack.c.l.b16 %v18
  %v35 = vpack.c.b16 %v34, %v33
  %v38 = vunpack.c.l.b16 %v15
  %v39 = vunpack.c.l.b16 %v16
  %v40 = vpack.c.b16 %v39, %v38
  %vm42 = vcmask 130048
  %v44 = vsel %vm42, %v35, 0
  %46 = vmatprep.subr.bf16.mxu0 0
  %47 = vmatpush1.bf16.msra.mxu0 0
  %48 = vmatprep.subr.bf16.mxu0 0
  %49 = vmatpush1.bf16.msra.mxu0 0
  %50 = vmatprep.subr.bf16.mxu0 0
  %51 = vmatpush1.bf16.msra.mxu0 0
  %52 = vmatprep.subr.bf16.mxu0 0
  %53 = vmatpush1.bf16.msra.mxu0 0
  %54 = vmatprep.subr.bf16.mxu0 0
  %55 = vmatpush1.bf16.msra.mxu0 0
  %56 = vmatprep.subr.bf16.mxu0 0
  %57 = vmatpush1.bf16.msra.mxu0 0
  %58 = vmatprep.subr.bf16.mxu0 0
  %59 = vmatpush1.bf16.msra.mxu0 0
  %60 = vmatprep.subr.bf16.mxu0 0
  %61 = vmatpush1.bf16.msra.mxu0 %v40
  %62 = vmatprep.subr.bf16.mxu0 0
  %63 = vmatpush2.bf16.msra.mxu0 0
  %64 = vmatprep.subr.bf16.mxu0 0
  %65 = vmatpush2.bf16.msra.mxu0 0
  %66 = vmatprep.subr.bf16.mxu0 0
  %67 = vmatpush2.bf16.msra.mxu0 0
  %68 = vmatprep.subr.bf16.mxu0 0
  %69 = vmatpush2.bf16.msra.mxu0 0
  %70 = vmatprep.subr.bf16.mxu0 0
  %71 = vmatpush2.bf16.msra.mxu0 0
  %72 = vmatprep.subr.bf16.mxu0 0
  %73 = vmatpush2.bf16.msra.mxu0 0
  %74 = vmatprep.subr.bf16.mxu0 0
  %75 = vmatpush2.bf16.msra.mxu0 0
  %76 = vmatprep.subr.bf16.mxu0 0
  %77 = vmatpush2.bf16.msra.mxu0 0
  %78 = vmatprep.mubr.bf16.mxu0 0
  %79 = vmatmul.mubr.bf16.gmra.mxu0 %v44
  %v80 = vpop.f32.mrf.mxu0
  %v81 = vadd.f32 %v24, %v80
  %v82 = vpop.f32.mrf.mxu0
  %v83 = vpop.f32.mrf.mxu0
  %v84 = vadd.f32 %v29, %v83
  %v85 = vpop.f32.mrf.mxu0
  %86 = vdwg.mxu0
  %v87 = vmul.f32 %v81, 0.5
  %v88 = vmul.f32 %v84, 0.5
  %v89 = vtanh.pop %v87
  %v90 = vtanh.pop %v88
  %v91 = vadd.f32 %v89, 1.0
  %v92 = vadd.f32 %v90, 1.0
  %v93 = vmul.f32 %v91, 0.5
  %v94 = vmul.f32 %v92, 0.5
  %v95 = vpack.c.bf16 %v94, %v93
  %s96 = scalar_lea.vmem %s1, 8
  %v97 = vld [vmem:[%s96] sm:$0xf]
  %v98 = vld [vmem:[%s96 + $0x4] sm:$0xf]
  %s99 = scalar_lea.vmem %s2, 16
  %v100 = vld [vmem:[%s99] sm:$0xff]
  %v101 = vld [vmem:[%s99 + $0x8] sm:$0xff]
  %103 = vset.pattern.permute.xlu0 0
  %104 = vperm.xlu0 %103, %v100
  %v105 = vpop.permute.xlu0 %104
  %108 = vset.pattern.permute.xlu0 0
  %109 = vperm.xlu0 %108, %v101
  %v110 = vpop.permute.xlu0 %109
  %v114 = vunpack.c.l.b16 %v97
  %v115 = vunpack.c.l.b16 %v98
  %v116 = vpack.c.b16 %v115, %v114
  %v118 = vsel %vm42, %v116, 0
  %120 = vmatprep.subr.bf16.mxu0 0
  %121 = vmatpush1.bf16.msra.mxu0 0
  %122 = vmatprep.subr.bf16.mxu0 0
  %123 = vmatpush1.bf16.msra.mxu0 0
  %124 = vmatprep.subr.bf16.mxu0 0
  %125 = vmatpush1.bf16.msra.mxu0 0
  %126 = vmatprep.subr.bf16.mxu0 0
  %127 = vmatpush1.bf16.msra.mxu0 0
  %128 = vmatprep.subr.bf16.mxu0 0
  %129 = vmatpush1.bf16.msra.mxu0 0
  %130 = vmatprep.subr.bf16.mxu0 0
  %131 = vmatpush1.bf16.msra.mxu0 0
  %132 = vmatprep.subr.bf16.mxu0 0
  %133 = vmatpush1.bf16.msra.mxu0 0
  %134 = vmatprep.subr.bf16.mxu0 0
  %135 = vmatpush1.bf16.msra.mxu0 %v95
  %136 = vmatprep.subr.bf16.mxu0 0
  %137 = vmatpush2.bf16.msra.mxu0 0
  %138 = vmatprep.subr.bf16.mxu0 0
  %139 = vmatpush2.bf16.msra.mxu0 0
  %140 = vmatprep.subr.bf16.mxu0 0
  %141 = vmatpush2.bf16.msra.mxu0 0
  %142 = vmatprep.subr.bf16.mxu0 0
  %143 = vmatpush2.bf16.msra.mxu0 0
  %144 = vmatprep.subr.bf16.mxu0 0
  %145 = vmatpush2.bf16.msra.mxu0 0
  %146 = vmatprep.subr.bf16.mxu0 0
  %147 = vmatpush2.bf16.msra.mxu0 0
  %148 = vmatprep.subr.bf16.mxu0 0
  %149 = vmatpush2.bf16.msra.mxu0 0
  %150 = vmatprep.subr.bf16.mxu0 0
  %151 = vmatpush2.bf16.msra.mxu0 0
  %152 = vmatprep.mubr.bf16.mxu0 0
  %153 = vmatmul.mubr.bf16.gmra.mxu0 %v118
  %v154 = vpop.f32.mrf.mxu0
  %v155 = vadd.f32 %v105, %v154
  %v156 = vpop.f32.mrf.mxu0
  %v157 = vpop.f32.mrf.mxu0
  %v158 = vadd.f32 %v110, %v157
  %v159 = vpop.f32.mrf.mxu0
  %160 = vdwg.mxu0
  %v161 = vmul.f32 %v155, 0.5
  %v162 = vmul.f32 %v158, 0.5
  %v163 = vtanh.pop %v161
  %v164 = vtanh.pop %v162
  %v165 = vadd.f32 %v163, 1.0
  %v166 = vadd.f32 %v164, 1.0
  %v167 = vmul.f32 %v165, 0.5
  %v168 = vmul.f32 %v166, 0.5
  %v169 = vpack.c.bf16 %v168, %v167
  %s170 = scalar_lea.vmem %s1, 16
  %v171 = vld [vmem:[%s170] sm:$0xf]
  %v172 = vld [vmem:[%s170 + $0x4] sm:$0xf]
  %s173 = scalar_lea.vmem %s2, 32
  %v174 = vld [vmem:[%s173] sm:$0xff]
  %v175 = vld [vmem:[%s173 + $0x8] sm:$0xff]
  %177 = vset.pattern.permute.xlu0 0
  %178 = vperm.xlu0 %177, %v174
  %v179 = vpop.permute.xlu0 %178
  %182 = vset.pattern.permute.xlu0 0
  %183 = vperm.xlu0 %182, %v175
  %v184 = vpop.permute.xlu0 %183
  %v188 = vunpack.c.l.b16 %v171
  %v189 = vunpack.c.l.b16 %v172
  %v190 = vpack.c.b16 %v189, %v188
  %v192 = vsel %vm42, %v190, 0
  %194 = vmatprep.subr.bf16.mxu0 0
  %195 = vmatpush1.bf16.msra.mxu0 0
  %196 = vmatprep.subr.bf16.mxu0 0
  %197 = vmatpush1.bf16.msra.mxu0 0
  %198 = vmatprep.subr.bf16.mxu0 0
  %199 = vmatpush1.bf16.msra.mxu0 0
  %200 = vmatprep.subr.bf16.mxu0 0
  %201 = vmatpush1.bf16.msra.mxu0 0
  %202 = vmatprep.subr.bf16.mxu0 0
  %203 = vmatpush1.bf16.msra.mxu0 0
  %204 = vmatprep.subr.bf16.mxu0 0
  %205 = vmatpush1.bf16.msra.mxu0 0
  %206 = vmatprep.subr.bf16.mxu0 0
  %207 = vmatpush1.bf16.msra.mxu0 0
  %208 = vmatprep.subr.bf16.mxu0 0
  %209 = vmatpush1.bf16.msra.mxu0 %v169
  %210 = vmatprep.subr.bf16.mxu0 0
  %211 = vmatpush2.bf16.msra.mxu0 0
  %212 = vmatprep.subr.bf16.mxu0 0
  %213 = vmatpush2.bf16.msra.mxu0 0
  %214 = vmatprep.subr.bf16.mxu0 0
  %215 = vmatpush2.bf16.msra.mxu0 0
  %216 = vmatprep.subr.bf16.mxu0 0
  %217 = vmatpush2.bf16.msra.mxu0 0
  %218 = vmatprep.subr.bf16.mxu0 0
  %219 = vmatpush2.bf16.msra.mxu0 0
  %220 = vmatprep.subr.bf16.mxu0 0
  %221 = vmatpush2.bf16.msra.mxu0 0
  %222 = vmatprep.subr.bf16.mxu0 0
  %223 = vmatpush2.bf16.msra.mxu0 0
  %224 = vmatprep.subr.bf16.mxu0 0
  %225 = vmatpush2.bf16.msra.mxu0 0
  %226 = vmatprep.mubr.bf16.mxu0 0
  %227 = vmatmul.mubr.bf16.gmra.mxu0 %v192
  %v228 = vpop.f32.mrf.mxu0
  %v229 = vadd.f32 %v179, %v228
  %v230 = vpop.f32.mrf.mxu0
  %v231 = vpop.f32.mrf.mxu0
  %v232 = vadd.f32 %v184, %v231
  %v233 = vpop.f32.mrf.mxu0
  %234 = vdwg.mxu0
  %v235 = vmul.f32 %v229, 0.5
  %v236 = vmul.f32 %v232, 0.5
  %v237 = vtanh.pop %v235
  %v238 = vtanh.pop %v236
  %v239 = vadd.f32 %v237, 1.0
  %v240 = vadd.f32 %v238, 1.0
  %v241 = vmul.f32 %v239, 0.5
  %v242 = vmul.f32 %v240, 0.5
  %v243 = vpack.c.bf16 %v242, %v241
  %s244 = scalar_lea.vmem %s1, 24
  %v245 = vld [vmem:[%s244] sm:$0xf]
  %v246 = vld [vmem:[%s244 + $0x4] sm:$0xf]
  %s247 = scalar_lea.vmem %s2, 48
  %v248 = vld [vmem:[%s247] sm:$0xff]
  %v249 = vld [vmem:[%s247 + $0x8] sm:$0xff]
  %251 = vset.pattern.permute.xlu0 0
  %252 = vperm.xlu0 %251, %v248
  %v253 = vpop.permute.xlu0 %252
  %256 = vset.pattern.permute.xlu0 0
  %257 = vperm.xlu0 %256, %v249
  %v258 = vpop.permute.xlu0 %257
  %v262 = vunpack.c.l.b16 %v245
  %v263 = vunpack.c.l.b16 %v246
  %v264 = vpack.c.b16 %v263, %v262
  %v266 = vsel %vm42, %v264, 0
  %268 = vmatprep.subr.bf16.mxu0 0
  %269 = vmatpush1.bf16.msra.mxu0 0
  %270 = vmatprep.subr.bf16.mxu0 0
  %271 = vmatpush1.bf16.msra.mxu0 0
  %272 = vmatprep.subr.bf16.mxu0 0
  %273 = vmatpush1.bf16.msra.mxu0 0
  %274 = vmatprep.subr.bf16.mxu0 0
  %275 = vmatpush1.bf16.msra.mxu0 0
  %276 = vmatprep.subr.bf16.mxu0 0
  %277 = vmatpush1.bf16.msra.mxu0 0
  %278 = vmatprep.subr.bf16.mxu0 0
  %279 = vmatpush1.bf16.msra.mxu0 0
  %280 = vmatprep.subr.bf16.mxu0 0
  %281 = vmatpush1.bf16.msra.mxu0 0
  %282 = vmatprep.subr.bf16.mxu0 0
  %283 = vmatpush1.bf16.msra.mxu0 %v243
  %284 = vmatprep.subr.bf16.mxu0 0
  %285 = vmatpush2.bf16.msra.mxu0 0
  %286 = vmatprep.subr.bf16.mxu0 0
  %287 = vmatpush2.bf16.msra.mxu0 0
  %288 = vmatprep.subr.bf16.mxu0 0
  %289 = vmatpush2.bf16.msra.mxu0 0
  %290 = vmatprep.subr.bf16.mxu0 0
  %291 = vmatpush2.bf16.msra.mxu0 0
  %292 = vmatprep.subr.bf16.mxu0 0
  %293 = vmatpush2.bf16.msra.mxu0 0
  %294 = vmatprep.subr.bf16.mxu0 0
  %295 = vmatpush2.bf16.msra.mxu0 0
  %296 = vmatprep.subr.bf16.mxu0 0
  %297 = vmatpush2.bf16.msra.mxu0 0
  %298 = vmatprep.subr.bf16.mxu0 0
  %299 = vmatpush2.bf16.msra.mxu0 0
  %300 = vmatprep.mubr.bf16.mxu0 0
  %301 = vmatmul.mubr.bf16.gmra.mxu0 %v266
  %v302 = vpop.f32.mrf.mxu0
  %v303 = vadd.f32 %v253, %v302
  %v304 = vpop.f32.mrf.mxu0
  %v305 = vpop.f32.mrf.mxu0
  %v306 = vadd.f32 %v258, %v305
  %v307 = vpop.f32.mrf.mxu0
  %308 = vdwg.mxu0
  %v309 = vmul.f32 %v303, 0.5
  %v310 = vmul.f32 %v306, 0.5
  %v311 = vtanh.pop %v309
  %v312 = vtanh.pop %v310
  %v313 = vadd.f32 %v311, 1.0
  %v314 = vadd.f32 %v312, 1.0
  %v315 = vmul.f32 %v313, 0.5
  %v316 = vmul.f32 %v314, 0.5
  %v317 = vpack.c.bf16 %v316, %v315
  %s318 = scalar_lea.vmem %s1, 32
  %v319 = vld [vmem:[%s318] sm:$0xf]
  %v320 = vld [vmem:[%s318 + $0x4] sm:$0xf]
  %s321 = scalar_lea.vmem %s2, 64
  %v322 = vld [vmem:[%s321] sm:$0xff]
  %v323 = vld [vmem:[%s321 + $0x8] sm:$0xff]
  %325 = vset.pattern.permute.xlu0 0
  %326 = vperm.xlu0 %325, %v322
  %v327 = vpop.permute.xlu0 %326
  %330 = vset.pattern.permute.xlu0 0
  %331 = vperm.xlu0 %330, %v323
  %v332 = vpop.permute.xlu0 %331
  %v335 = vunpack.c.l.b16 %v319
  %v336 = vunpack.c.l.b16 %v320
  %v337 = vpack.c.b16 %v336, %v335
  %v339 = vsel %vm42, %v337, 0
  %341 = vmatprep.subr.bf16.mxu0 0
  %342 = vmatpush1.bf16.msra.mxu0 0
  %343 = vmatprep.subr.bf16.mxu0 0
  %344 = vmatpush1.bf16.msra.mxu0 0
  %345 = vmatprep.subr.bf16.mxu0 0
  %346 = vmatpush1.bf16.msra.mxu0 0
  %347 = vmatprep.subr.bf16.mxu0 0
  %348 = vmatpush1.bf16.msra.mxu0 0
  %349 = vmatprep.subr.bf16.mxu0 0
  %350 = vmatpush1.bf16.msra.mxu0 0
  %351 = vmatprep.subr.bf16.mxu0 0
  %352 = vmatpush1.bf16.msra.mxu0 0
  %353 = vmatprep.subr.bf16.mxu0 0
  %354 = vmatpush1.bf16.msra.mxu0 0
  %355 = vmatprep.subr.bf16.mxu0 0
  %356 = vmatpush1.bf16.msra.mxu0 %v317
  %357 = vmatprep.subr.bf16.mxu0 0
  %358 = vmatpush2.bf16.msra.mxu0 0
  %359 = vmatprep.subr.bf16.mxu0 0
  %360 = vmatpush2.bf16.msra.mxu0 0
  %361 = vmatprep.subr.bf16.mxu0 0
  %362 = vmatpush2.bf16.msra.mxu0 0
  %363 = vmatprep.subr.bf16.mxu0 0
  %364 = vmatpush2.bf16.msra.mxu0 0
  %365 = vmatprep.subr.bf16.mxu0 0
  %366 = vmatpush2.bf16.msra.mxu0 0
  %367 = vmatprep.subr.bf16.mxu0 0
  %368 = vmatpush2.bf16.msra.mxu0 0
  %369 = vmatprep.subr.bf16.mxu0 0
  %370 = vmatpush2.bf16.msra.mxu0 0
  %371 = vmatprep.subr.bf16.mxu0 0
  %372 = vmatpush2.bf16.msra.mxu0 0
  %373 = vmatprep.mubr.bf16.mxu0 0
  %374 = vmatmul.mubr.bf16.gmra.mxu0 %v339
  %v375 = vpop.f32.mrf.mxu0
  %v376 = vadd.f32 %v327, %v375
  %v377 = vpop.f32.mrf.mxu0
  %v378 = vpop.f32.mrf.mxu0
  %v379 = vpop.f32.mrf.mxu0
  %380 = vdwg.mxu0
  %381 = vst [vmem:[%s3] sm:$0xff] %v376
  // Predicated region
  $region14: #{net_forward.1} parent=0 // pred_check
    _
  $region15: #{net_forward.1} parent=0 // pred_check_branch
    %383 = sbr.rel (0) target = $region17
  $region16: #{net_forward.1} parent=0 // pred_region
    _
  $region17: #{net_forward.1} parent=0 // pred_fallthru
    _
  // Predicated region
  $region18: #{net_forward.1} parent=0 // pred_check
    _
  $region19: #{net_forward.1} parent=0 // pred_check_branch
    %385 = sbr.rel (0) target = $region21
  $region20: #{net_forward.1} parent=0 // pred_region
    _
  $region21: #{net_forward.1} parent=0 // pred_fallthru
    _

</llo_original>
